<compile_context>
chip_gen: v7x
topology: tpu7x:2x2x1
jax: 0.10.0
libtpu: 0.0.40
codegen_flags: <defaults>
</compile_context>

<pallas_src>
import functools

import jax
import jax.numpy as jnp
import numpy as np
from jax import lax
from jax.experimental import pallas as pl
from jax.experimental.pallas import tpu as pltpu

_TAPS = tuple((dy, dx) for dy in (-1, 0, 1) for dx in (-1, 0, 1))


def _bottleneck_kernel(x_ref, m_ref, w1_ref, b1_ref, w2_ref, b2_ref, out_ref,
                       *, H, W, K1, K2, add):
    """One batch block per grid step.

    x_ref  : (R1, HW) VMEM — rows are (batch, in_channel), lanes are pixels
    m_ref  : (9, HW)  VMEM — 0/1 boundary masks, one row per 3x3 tap
    w1_ref : (Rm, K1) VMEM — cv1 weights (BN scale folded), block-diag over the
                             batch, columns ordered (tap, batch, in_channel),
                             zero-padded to the MXU-aligned K1
    b1_ref : (Rm, 1)  VMEM — cv1 folded-BN bias per (batch, mid_channel) row
    w2_ref : (R2, K2) VMEM
    b2_ref : (R2, 1)  VMEM
    out_ref: (R2, HW) VMEM
    """
    HW = H * W

    def conv_bn_silu(a, w_ref, b_ref, k_pad):
        # a: (rows_in, HW).  Build the im2col RHS: 9 lane-rolled (XLU) and
        # boundary-masked (one VALU mul, channel/batch-invariant) copies of the
        # whole channel-stacked block, zero-padded to k_pad rows so the matmul
        # is exactly MXU-tile shaped and padding lanes can never contribute.
        rows_in = a.shape[0]
        blocks = []
        for t, (dy, dx) in enumerate(_TAPS):
            off = dy * W + dx
            if off == 0:
                blocks.append(a)                              # centre tap: as-is
            else:
                sh = pltpu.roll(a, shift=(-off) % HW, axis=1)  # XLU lane roll
                blocks.append(sh * m_ref[pl.ds(t, 1), :])      # zero halo lanes
        pad_rows = k_pad - 9 * rows_in
        if pad_rows:
            blocks.append(jnp.zeros((pad_rows, HW), jnp.float32))
        rhs = jnp.concatenate(blocks, axis=0)                  # (k_pad, HW)

        # Fused conv + BN-scale contraction on the otherwise-idle MXU.
        y = jnp.dot(w_ref[...], rhs, preferred_element_type=jnp.float32)
        y = y + b_ref[...]                                     # bias, lane bcast
        # SiLU: exp -> EUP; exact reciprocal to stay inside the 1e-4 tolerance.
        return y * pl.reciprocal(1.0 + jnp.exp(-y), approx=False)

    x = x_ref[...]                                             # (R1, HW)
    y1 = conv_bn_silu(x, w1_ref, b1_ref, K1)                   # (Rm, HW)
    y2 = conv_bn_silu(y1, w2_ref, b2_ref, K2)                  # (R2, HW)
    out_ref[...] = y2 + x if add else y2


def _fold_bn(gamma, beta, mean, var, eps=1e-3):
    scale = (gamma / jnp.sqrt(var + eps)).astype(jnp.float32)
    bias = (beta - mean * scale).astype(jnp.float32)
    return scale, bias


def bottleneck_pallas(x_nchw, params, *, shortcut=True):
    """x_nchw: (B, C1, H, W) float32; conv weights in OIHW (PyTorch layout)."""
    w1, g1, be1, m1, v1, w2, g2, be2, m2, v2 = params
    B, C1, H, W = x_nchw.shape
    C_, C2 = w1.shape[0], w2.shape[0]
    HW = H * W
    add = bool(shortcut and C1 == C2)

    # --- batch blocking: fill the 8 sublanes of a vreg per grid step ---------
    bb = min(B, max(1, 8 // max(C1, C2)))
    while B % bb:
        bb -= 1
    nb = B // bb
    if nb > 1 and ((bb * C1) % 8 or (bb * C2) % 8):
        bb, nb = B, 1                       # fall back to full-array blocks
    # pad hidden channels so the mid activation fills whole 8-sublane tiles
    C_p = C_
    while (bb * C_p) % 8:
        C_p += 1

    R1, Rm, R2 = bb * C1, bb * C_p, bb * C2
    K1 = int(np.ceil(9 * R1 / 128) * 128)   # MXU-tile-aligned contraction dims
    K2 = int(np.ceil(9 * Rm / 128) * 128)

    # --- fold BatchNorm (eval) into conv weights / per-row bias --------------
    s1, b1 = _fold_bn(g1, be1, m1, v1)
    s2, b2 = _fold_bn(g2, be2, m2, v2)

    eye = jnp.eye(bb, dtype=jnp.float32)

    def big_weight(w, scale, cout, cin, cout_p, cin_p, k_pad):
        # w: (cout, cin, 3, 3) OIHW -> (bb*cout_p, k_pad) block-diag over batch,
        # columns ordered (tap, batch, in_channel); BN scale folded in.
        ws = (w.astype(jnp.float32) * scale[:, None, None, None]).reshape(cout, cin, 9)
        ws = jnp.pad(ws, ((0, cout_p - cout), (0, cin_p - cin), (0, 0)))
        big = jnp.einsum('oit,bc->botci', ws, eye)
        big = big.reshape(bb * cout_p, 9 * bb * cin_p)
        return jnp.pad(big, ((0, 0), (0, k_pad - big.shape[1])))

    W1 = big_weight(w1, s1, C_, C1, C_p, C1, K1)       # (Rm, K1)
    W2 = big_weight(w2, s2, C2, C_, C2, C_p, K2)       # (R2, K2)
    b1col = jnp.tile(jnp.pad(b1, (0, C_p - C_)), bb).reshape(Rm, 1)
    b2col = jnp.tile(b2, bb).reshape(R2, 1)

    # --- boundary masks: shape-only constants, one (1, HW) row per tap -------
    ys, xs = np.divmod(np.arange(HW), W)
    masks = np.stack([((ys + dy >= 0) & (ys + dy < H) &
                       (xs + dx >= 0) & (xs + dx < W))
                      for dy, dx in _TAPS]).astype(np.float32)
    masks = jnp.asarray(masks)                          # (9, HW)

    # Lane-dense flat layout: free reshape of contiguous NCHW.
    x_flat = x_nchw.astype(jnp.float32).reshape(B * C1, HW)

    kernel = functools.partial(_bottleneck_kernel, H=H, W=W, K1=K1, K2=K2,
                               add=add)

    def const_spec(shape):
        return pl.BlockSpec(shape, lambda i: (0,) * len(shape))

    flops = 2 * B * HW * 9 * (C1 * C_ + C_ * C2) + 10 * B * HW * (C_ + C2)
    transcendentals = B * HW * (C_ + C2)
    bytes_accessed = 4 * (B * HW * (C1 + C2) + masks.size + W1.size + W2.size
                          + b1col.size + b2col.size)

    out = pl.pallas_call(
        kernel,
        out_shape=jax.ShapeDtypeStruct((B * C2, HW), jnp.float32),
        grid=(nb,),
        in_specs=[
            pl.BlockSpec((R1, HW), lambda i: (i, 0)),
            const_spec((9, HW)),
            const_spec((Rm, K1)), const_spec((Rm, 1)),
            const_spec((R2, K2)), const_spec((R2, 1)),
        ],
        out_specs=pl.BlockSpec((R2, HW), lambda i: (i, 0)),
        compiler_params=pltpu.CompilerParams(
            dimension_semantics=("parallel",)),
        cost_estimate=pl.CostEstimate(flops=int(flops),
                                      transcendentals=int(transcendentals),
                                      bytes_accessed=int(bytes_accessed)),
    )(x_flat, masks, W1, b1col, W2, b2col)

    return out.reshape(B, C2, H, W)


def bottleneck_reference(x_nchw, params, *, shortcut=True):
    """Pure-JAX reference (NCHW / OIHW) for correctness checking."""
    w1, g1, be1, m1, v1, w2, g2, be2, m2, v2 = params
    eps = 1e-3

    def conv_bn_silu(x, w, g, be, m, v):
        y = lax.conv_general_dilated(
            x, w, window_strides=(1, 1), padding=((1, 1), (1, 1)),
            dimension_numbers=("NCHW", "OIHW", "NCHW"),
            precision=lax.Precision.HIGHEST)
        g_, be_, m_, v_ = (t[None, :, None, None] for t in (g, be, m, v))
        y = (y - m_) / jnp.sqrt(v_ + eps) * g_ + be_
        return y * jax.nn.sigmoid(y)

    y = conv_bn_silu(x_nchw, w1, g1, be1, m1, v1)
    y = conv_bn_silu(y, w2, g2, be2, m2, v2)
    if shortcut and x_nchw.shape[1] == y.shape[1]:
        y = x_nchw + y
    return y


if __name__ == "__main__":
    # Shapes consistent with Bottleneck(c1=4, c2=4, k=(3,3), e=0.5): c_ = 2.
    B, H, W = 2, 16, 16
    c1, c2, e = 4, 4, 0.5
    c_ = int(c2 * e)

    key = jax.random.PRNGKey(0)
    keys = jax.random.split(key, 9)

    x = jax.random.normal(keys[0], (B, c1, H, W), jnp.float32)          # NCHW

    # Deterministic synthetic parameters (OIHW conv weights, BN params).
    w1 = 0.1 * jax.random.normal(keys[1], (c_, c1, 3, 3), jnp.float32)
    gamma1 = 1.0 + 0.1 * jax.random.normal(keys[2], (c_,), jnp.float32)
    beta1 = 0.1 * jax.random.normal(keys[3], (c_,), jnp.float32)
    mean1 = 0.05 * jax.random.normal(keys[4], (c_,), jnp.float32)
    var1 = jnp.abs(1.0 + 0.1 * jax.random.normal(keys[5], (c_,), jnp.float32))

    w2 = 0.1 * jax.random.normal(keys[6], (c2, c_, 3, 3), jnp.float32)
    gamma2 = 1.0 + 0.1 * jax.random.normal(keys[7], (c2,), jnp.float32)
    beta2 = 0.1 * jax.random.normal(keys[8], (c2,), jnp.float32)
    mean2 = jnp.zeros((c2,), jnp.float32)
    var2 = jnp.ones((c2,), jnp.float32)

    params = (w1, gamma1, beta1, mean1, var1, w2, gamma2, beta2, mean2, var2)

    out = bottleneck_pallas(x, params, shortcut=True)
    out = jax.block_until_ready(out)

    ref = bottleneck_reference(x, params, shortcut=True)
    np.testing.assert_allclose(np.asarray(out), np.asarray(ref),
                               rtol=1e-4, atol=1e-4)

    print("KERNEL_OK")
</pallas_src>

<mosaic_0001>
module attributes {stable_mosaic.version = 11 : i64} {
  func.func @_bottleneck_kernel(%arg0: i32, %arg1: memref<8x256xf32, #tpu.memory_space<vmem>>, %arg2: memref<9x256xf32, #tpu.memory_space<vmem>>, %arg3: memref<8x128xf32, #tpu.memory_space<vmem>>, %arg4: memref<8x1xf32, #tpu.memory_space<vmem>>, %arg5: memref<8x128xf32, #tpu.memory_space<vmem>>, %arg6: memref<8x1xf32, #tpu.memory_space<vmem>>, %arg7: memref<8x256xf32, #tpu.memory_space<vmem>>) attributes {dimension_semantics = [#tpu.dimension_semantics<parallel>], iteration_bounds = array<i64: 1>, scalar_prefetch = 0 : i64, scratch_operands = 0 : i64, tpu.core_type = #tpu.core_type<tc>, window_params = [{transform_indices = @transform_0, window_bounds = array<i64: 8, 256>}, {pipeline_mode = #tpu.pipeline_mode<synchronous>, transform_indices = @transform_1, window_bounds = array<i64: 9, 256>}, {pipeline_mode = #tpu.pipeline_mode<synchronous>, transform_indices = @transform_2, window_bounds = array<i64: 8, 128>}, {pipeline_mode = #tpu.pipeline_mode<synchronous>, transform_indices = @transform_3, window_bounds = array<i64: 8, 1>}, {pipeline_mode = #tpu.pipeline_mode<synchronous>, transform_indices = @transform_4, window_bounds = array<i64: 8, 128>}, {pipeline_mode = #tpu.pipeline_mode<synchronous>, transform_indices = @transform_5, window_bounds = array<i64: 8, 1>}, {transform_indices = @transform_6, window_bounds = array<i64: 8, 256>}]} {
    %c0 = arith.constant 0 : index
    %c0_0 = arith.constant 0 : index
    %0 = vector.load %arg1[%c0, %c0_0] : memref<8x256xf32, #tpu.memory_space<vmem>>, vector<8x256xf32>
    %c17_i32 = arith.constant 17 : i32
    %1 = tpu.dynamic_rotate %0 by %c17_i32 dim 1 : vector<8x256xf32>, i32 -> vector<8x256xf32>
    %c0_1 = arith.constant 0 : index
    %c0_2 = arith.constant 0 : index
    %2 = vector.load %arg2[%c0_1, %c0_2] : memref<9x256xf32, #tpu.memory_space<vmem>>, vector<1x256xf32>
    %3 = vector.broadcast %2 : vector<1x256xf32> to vector<8x256xf32>
    %4 = arith.mulf %1, %3 : vector<8x256xf32>
    %c16_i32 = arith.constant 16 : i32
    %5 = tpu.dynamic_rotate %0 by %c16_i32 dim 1 : vector<8x256xf32>, i32 -> vector<8x256xf32>
    %c1 = arith.constant 1 : index
    %c0_3 = arith.constant 0 : index
    %6 = vector.load %arg2[%c1, %c0_3] : memref<9x256xf32, #tpu.memory_space<vmem>>, vector<1x256xf32>
    %7 = vector.broadcast %6 : vector<1x256xf32> to vector<8x256xf32>
    %8 = arith.mulf %5, %7 : vector<8x256xf32>
    %c15_i32 = arith.constant 15 : i32
    %9 = tpu.dynamic_rotate %0 by %c15_i32 dim 1 : vector<8x256xf32>, i32 -> vector<8x256xf32>
    %c2 = arith.constant 2 : index
    %c0_4 = arith.constant 0 : index
    %10 = vector.load %arg2[%c2, %c0_4] : memref<9x256xf32, #tpu.memory_space<vmem>>, vector<1x256xf32>
    %11 = vector.broadcast %10 : vector<1x256xf32> to vector<8x256xf32>
    %12 = arith.mulf %9, %11 : vector<8x256xf32>
    %c1_i32 = arith.constant 1 : i32
    %13 = tpu.dynamic_rotate %0 by %c1_i32 dim 1 : vector<8x256xf32>, i32 -> vector<8x256xf32>
    %c3 = arith.constant 3 : index
    %c0_5 = arith.constant 0 : index
    %14 = vector.load %arg2[%c3, %c0_5] : memref<9x256xf32, #tpu.memory_space<vmem>>, vector<1x256xf32>
    %15 = vector.broadcast %14 : vector<1x256xf32> to vector<8x256xf32>
    %16 = arith.mulf %13, %15 : vector<8x256xf32>
    %c255_i32 = arith.constant 255 : i32
    %17 = tpu.dynamic_rotate %0 by %c255_i32 dim 1 : vector<8x256xf32>, i32 -> vector<8x256xf32>
    %c5 = arith.constant 5 : index
    %c0_6 = arith.constant 0 : index
    %18 = vector.load %arg2[%c5, %c0_6] : memref<9x256xf32, #tpu.memory_space<vmem>>, vector<1x256xf32>
    %19 = vector.broadcast %18 : vector<1x256xf32> to vector<8x256xf32>
    %20 = arith.mulf %17, %19 : vector<8x256xf32>
    %c241_i32 = arith.constant 241 : i32
    %21 = tpu.dynamic_rotate %0 by %c241_i32 dim 1 : vector<8x256xf32>, i32 -> vector<8x256xf32>
    %c6 = arith.constant 6 : index
    %c0_7 = arith.constant 0 : index
    %22 = vector.load %arg2[%c6, %c0_7] : memref<9x256xf32, #tpu.memory_space<vmem>>, vector<1x256xf32>
    %23 = vector.broadcast %22 : vector<1x256xf32> to vector<8x256xf32>
    %24 = arith.mulf %21, %23 : vector<8x256xf32>
    %c240_i32 = arith.constant 240 : i32
    %25 = tpu.dynamic_rotate %0 by %c240_i32 dim 1 : vector<8x256xf32>, i32 -> vector<8x256xf32>
    %c7 = arith.constant 7 : index
    %c0_8 = arith.constant 0 : index
    %26 = vector.load %arg2[%c7, %c0_8] : memref<9x256xf32, #tpu.memory_space<vmem>>, vector<1x256xf32>
    %27 = vector.broadcast %26 : vector<1x256xf32> to vector<8x256xf32>
    %28 = arith.mulf %25, %27 : vector<8x256xf32>
    %c239_i32 = arith.constant 239 : i32
    %29 = tpu.dynamic_rotate %0 by %c239_i32 dim 1 : vector<8x256xf32>, i32 -> vector<8x256xf32>
    %c8 = arith.constant 8 : index
    %c0_9 = arith.constant 0 : index
    %30 = vector.load %arg2[%c8, %c0_9] : memref<9x256xf32, #tpu.memory_space<vmem>>, vector<1x256xf32>
    %31 = vector.broadcast %30 : vector<1x256xf32> to vector<8x256xf32>
    %32 = arith.mulf %29, %31 : vector<8x256xf32>
    %cst = arith.constant 0.000000e+00 : f32
    %33 = vector.broadcast %cst : f32 to vector<56x256xf32>
    %34 = tpu.concatenate %4, %8, %12, %16, %0, %20, %24, %28, %32, %33 in 0 : vector<8x256xf32>, vector<8x256xf32>, vector<8x256xf32>, vector<8x256xf32>, vector<8x256xf32>, vector<8x256xf32>, vector<8x256xf32>, vector<8x256xf32>, vector<8x256xf32>, vector<56x256xf32> -> vector<128x256xf32>
    %c0_10 = arith.constant 0 : index
    %c0_11 = arith.constant 0 : index
    %35 = vector.load %arg3[%c0_10, %c0_11] : memref<8x128xf32, #tpu.memory_space<vmem>>, vector<8x128xf32>
    %cst_12 = arith.constant dense<0.000000e+00> : vector<8x256xf32>
    %36 = tpu.matmul %35, %34, %cst_12 {dimension_numbers = #tpu.dot_dimension_numbers<[1], [0], [0], [1], [0, 0, 1, 1], [], []>} : vector<8x128xf32>, vector<128x256xf32>, vector<8x256xf32> -> vector<8x256xf32>
    %c0_13 = arith.constant 0 : index
    %c0_14 = arith.constant 0 : index
    %37 = vector.load %arg4[%c0_13, %c0_14] : memref<8x1xf32, #tpu.memory_space<vmem>>, vector<8x1xf32>
    %38 = vector.broadcast %37 : vector<8x1xf32> to vector<8x256xf32>
    %39 = arith.addf %36, %38 : vector<8x256xf32>
    %cst_15 = arith.constant 0.000000e+00 : f32
    %40 = vector.broadcast %cst_15 : f32 to vector<8x256xf32>
    %41 = arith.subf %40, %39 : vector<8x256xf32>
    %42 = math.exp %41 : vector<8x256xf32>
    %cst_16 = arith.constant 1.000000e+00 : f32
    %43 = vector.broadcast %cst_16 : f32 to vector<8x256xf32>
    %44 = arith.addf %43, %42 : vector<8x256xf32>
    %45 = tpu.reciprocal %44 : vector<8x256xf32> -> vector<8x256xf32>
    %46 = arith.mulf %39, %45 : vector<8x256xf32>
    %c17_i32_17 = arith.constant 17 : i32
    %47 = tpu.dynamic_rotate %46 by %c17_i32_17 dim 1 : vector<8x256xf32>, i32 -> vector<8x256xf32>
    %c0_18 = arith.constant 0 : index
    %c0_19 = arith.constant 0 : index
    %48 = vector.load %arg2[%c0_18, %c0_19] : memref<9x256xf32, #tpu.memory_space<vmem>>, vector<1x256xf32>
    %49 = vector.broadcast %48 : vector<1x256xf32> to vector<8x256xf32>
    %50 = arith.mulf %47, %49 : vector<8x256xf32>
    %c16_i32_20 = arith.constant 16 : i32
    %51 = tpu.dynamic_rotate %46 by %c16_i32_20 dim 1 : vector<8x256xf32>, i32 -> vector<8x256xf32>
    %c1_21 = arith.constant 1 : index
    %c0_22 = arith.constant 0 : index
    %52 = vector.load %arg2[%c1_21, %c0_22] : memref<9x256xf32, #tpu.memory_space<vmem>>, vector<1x256xf32>
    %53 = vector.broadcast %52 : vector<1x256xf32> to vector<8x256xf32>
    %54 = arith.mulf %51, %53 : vector<8x256xf32>
    %c15_i32_23 = arith.constant 15 : i32
    %55 = tpu.dynamic_rotate %46 by %c15_i32_23 dim 1 : vector<8x256xf32>, i32 -> vector<8x256xf32>
    %c2_24 = arith.constant 2 : index
    %c0_25 = arith.constant 0 : index
    %56 = vector.load %arg2[%c2_24, %c0_25] : memref<9x256xf32, #tpu.memory_space<vmem>>, vector<1x256xf32>
    %57 = vector.broadcast %56 : vector<1x256xf32> to vector<8x256xf32>
    %58 = arith.mulf %55, %57 : vector<8x256xf32>
    %c1_i32_26 = arith.constant 1 : i32
    %59 = tpu.dynamic_rotate %46 by %c1_i32_26 dim 1 : vector<8x256xf32>, i32 -> vector<8x256xf32>
    %c3_27 = arith.constant 3 : index
    %c0_28 = arith.constant 0 : index
    %60 = vector.load %arg2[%c3_27, %c0_28] : memref<9x256xf32, #tpu.memory_space<vmem>>, vector<1x256xf32>
    %61 = vector.broadcast %60 : vector<1x256xf32> to vector<8x256xf32>
    %62 = arith.mulf %59, %61 : vector<8x256xf32>
    %c255_i32_29 = arith.constant 255 : i32
    %63 = tpu.dynamic_rotate %46 by %c255_i32_29 dim 1 : vector<8x256xf32>, i32 -> vector<8x256xf32>
    %c5_30 = arith.constant 5 : index
    %c0_31 = arith.constant 0 : index
    %64 = vector.load %arg2[%c5_30, %c0_31] : memref<9x256xf32, #tpu.memory_space<vmem>>, vector<1x256xf32>
    %65 = vector.broadcast %64 : vector<1x256xf32> to vector<8x256xf32>
    %66 = arith.mulf %63, %65 : vector<8x256xf32>
    %c241_i32_32 = arith.constant 241 : i32
    %67 = tpu.dynamic_rotate %46 by %c241_i32_32 dim 1 : vector<8x256xf32>, i32 -> vector<8x256xf32>
    %c6_33 = arith.constant 6 : index
    %c0_34 = arith.constant 0 : index
    %68 = vector.load %arg2[%c6_33, %c0_34] : memref<9x256xf32, #tpu.memory_space<vmem>>, vector<1x256xf32>
    %69 = vector.broadcast %68 : vector<1x256xf32> to vector<8x256xf32>
    %70 = arith.mulf %67, %69 : vector<8x256xf32>
    %c240_i32_35 = arith.constant 240 : i32
    %71 = tpu.dynamic_rotate %46 by %c240_i32_35 dim 1 : vector<8x256xf32>, i32 -> vector<8x256xf32>
    %c7_36 = arith.constant 7 : index
    %c0_37 = arith.constant 0 : index
    %72 = vector.load %arg2[%c7_36, %c0_37] : memref<9x256xf32, #tpu.memory_space<vmem>>, vector<1x256xf32>
    %73 = vector.broadcast %72 : vector<1x256xf32> to vector<8x256xf32>
    %74 = arith.mulf %71, %73 : vector<8x256xf32>
    %c239_i32_38 = arith.constant 239 : i32
    %75 = tpu.dynamic_rotate %46 by %c239_i32_38 dim 1 : vector<8x256xf32>, i32 -> vector<8x256xf32>
    %c8_39 = arith.constant 8 : index
    %c0_40 = arith.constant 0 : index
    %76 = vector.load %arg2[%c8_39, %c0_40] : memref<9x256xf32, #tpu.memory_space<vmem>>, vector<1x256xf32>
    %77 = vector.broadcast %76 : vector<1x256xf32> to vector<8x256xf32>
    %78 = arith.mulf %75, %77 : vector<8x256xf32>
    %cst_41 = arith.constant 0.000000e+00 : f32
    %79 = vector.broadcast %cst_41 : f32 to vector<56x256xf32>
    %80 = tpu.concatenate %50, %54, %58, %62, %46, %66, %70, %74, %78, %79 in 0 : vector<8x256xf32>, vector<8x256xf32>, vector<8x256xf32>, vector<8x256xf32>, vector<8x256xf32>, vector<8x256xf32>, vector<8x256xf32>, vector<8x256xf32>, vector<8x256xf32>, vector<56x256xf32> -> vector<128x256xf32>
    %c0_42 = arith.constant 0 : index
    %c0_43 = arith.constant 0 : index
    %81 = vector.load %arg5[%c0_42, %c0_43] : memref<8x128xf32, #tpu.memory_space<vmem>>, vector<8x128xf32>
    %cst_44 = arith.constant dense<0.000000e+00> : vector<8x256xf32>
    %82 = tpu.matmul %81, %80, %cst_44 {dimension_numbers = #tpu.dot_dimension_numbers<[1], [0], [0], [1], [0, 0, 1, 1], [], []>} : vector<8x128xf32>, vector<128x256xf32>, vector<8x256xf32> -> vector<8x256xf32>
    %c0_45 = arith.constant 0 : index
    %c0_46 = arith.constant 0 : index
    %83 = vector.load %arg6[%c0_45, %c0_46] : memref<8x1xf32, #tpu.memory_space<vmem>>, vector<8x1xf32>
    %84 = vector.broadcast %83 : vector<8x1xf32> to vector<8x256xf32>
    %85 = arith.addf %82, %84 : vector<8x256xf32>
    %cst_47 = arith.constant 0.000000e+00 : f32
    %86 = vector.broadcast %cst_47 : f32 to vector<8x256xf32>
    %87 = arith.subf %86, %85 : vector<8x256xf32>
    %88 = math.exp %87 : vector<8x256xf32>
    %cst_48 = arith.constant 1.000000e+00 : f32
    %89 = vector.broadcast %cst_48 : f32 to vector<8x256xf32>
    %90 = arith.addf %89, %88 : vector<8x256xf32>
    %91 = tpu.reciprocal %90 : vector<8x256xf32> -> vector<8x256xf32>
    %92 = arith.mulf %85, %91 : vector<8x256xf32>
    %93 = arith.addf %92, %0 : vector<8x256xf32>
    %c0_49 = arith.constant 0 : index
    %c0_50 = arith.constant 0 : index
    %94 = vector.load %arg7[%c0_49, %c0_50] : memref<8x256xf32, #tpu.memory_space<vmem>>, vector<8x256xf32>
    tpu.vector_store %arg7[%c0_49, %c0_50], %93 {strides = array<i32>} : memref<8x256xf32, #tpu.memory_space<vmem>>, vector<8x256xf32>,
    return
  }
  func.func @transform_0(%arg0: i32) -> (i32, i32) {
    %c0_i32 = arith.constant 0 : i32
    %c0_i32_0 = arith.constant 0 : i32
    return %arg0, %c0_i32 : i32, i32
  }
  func.func @transform_1(%arg0: i32) -> (i32, i32) {
    %c0_i32 = arith.constant 0 : i32
    %c0_i32_0 = arith.constant 0 : i32
    %c0_i32_1 = arith.constant 0 : i32
    return %c0_i32, %c0_i32_0 : i32, i32
  }
  func.func @transform_2(%arg0: i32) -> (i32, i32) {
    %c0_i32 = arith.constant 0 : i32
    %c0_i32_0 = arith.constant 0 : i32
    %c0_i32_1 = arith.constant 0 : i32
    return %c0_i32, %c0_i32_0 : i32, i32
  }
  func.func @transform_3(%arg0: i32) -> (i32, i32) {
    %c0_i32 = arith.constant 0 : i32
    %c0_i32_0 = arith.constant 0 : i32
    %c0_i32_1 = arith.constant 0 : i32
    return %c0_i32, %c0_i32_0 : i32, i32
  }
  func.func @transform_4(%arg0: i32) -> (i32, i32) {
    %c0_i32 = arith.constant 0 : i32
    %c0_i32_0 = arith.constant 0 : i32
    %c0_i32_1 = arith.constant 0 : i32
    return %c0_i32, %c0_i32_0 : i32, i32
  }
  func.func @transform_5(%arg0: i32) -> (i32, i32) {
    %c0_i32 = arith.constant 0 : i32
    %c0_i32_0 = arith.constant 0 : i32
    %c0_i32_1 = arith.constant 0 : i32
    return %c0_i32, %c0_i32_0 : i32, i32
  }
  func.func @transform_6(%arg0: i32) -> (i32, i32) {
    %c0_i32 = arith.constant 0 : i32
    %c0_i32_0 = arith.constant 0 : i32
    return %arg0, %c0_i32 : i32, i32
  }
}

</mosaic_0001>

<llo_original>
// kernel: tpu_custom_call.1
$region0: #{tpu_custom_call.1}
  #allocation0 [shape = 'u32[]', space=smem, size = 0x4, offset = 0x4, fixed_abs, tag = 'smem constant byte address 0x4 - core index']
  #allocation1 [shape = 'u32[144,128]{1,0:T(1,128)}', space=vmem, size = 0x12000, scoped, tag = 'internal scratch']
  %s0 = inlined_call_operand.vmem [shape: f32[8,256], index: 0, kind: input, shape index: {}]
  %s1 = inlined_call_operand.hbm [shape: f32[9,256], index: 1, kind: input, shape index: {}]
  %s2 = inlined_call_operand.vmem [shape: f32[8,128], index: 2, kind: input, shape index: {}]
  %s3 = inlined_call_operand.vmem [shape: f32[8,1], index: 3, kind: input, shape index: {}]
  %s4 = inlined_call_operand.vmem [shape: f32[8,128], index: 4, kind: input, shape index: {}]
  %s5 = inlined_call_operand.vmem [shape: f32[8,1], index: 5, kind: input, shape index: {}]
  %s6 = inlined_call_operand.hbm [shape: f32[8,256], index: 6, kind: output, shape index: {}]
  %s7 = sld [smem:[#allocation0]]
  $region38: #{tpu_custom_call.1} parent=0
    _
  %s9 = ssub.s32 1, %s7
  %s10 = scalar_select 0, %s9, %s7
  $region1: #{tpu_custom_call.1} parent=0
    #allocation2 [shape = 'u8[16384]{0}', space=vmem, size = 0x4000, scoped, tag = 'input window, operand 1, single buffered']
    #allocation3 [shape = 's32[1]{0}', space=sflag, size = 0x4, scoped, tag = 'scoped memory for tpu_custom_call.1']
    #allocation4 [shape = 's32[1]{0}', space=sflag, size = 0x4, scoped, tag = 'scoped memory for tpu_custom_call.1']
    #allocation5 [shape = 'u8[8192]{0}', space=vmem, size = 0x2000, scoped, tag = 'output window, operand 0, single buffered']
    %11 = vsyncpa [#allocation3], 0
    %12 = vsyncpa [#allocation4], 0
    // Predicated region
    $region2: #{tpu_custom_call.1} parent=1 // pred_check
      _
    $region3: #{tpu_custom_call.1} parent=1 // pred_check_branch
      %14 = sbr.rel (0) target = $region5
    $region4: #{tpu_custom_call.1} parent=1 // pred_region
      _
    $region5: #{tpu_custom_call.1} parent=1 // pred_fallthru
      _
    // Predicated region
    $region6: #{tpu_custom_call.1} parent=1 // pred_check
      _
    $region7: #{tpu_custom_call.1} parent=1 // pred_check_branch
      %16 = sbr.rel (0) target = $region9
    $region8: #{tpu_custom_call.1} parent=1 // pred_region
      %s18 = ssub.s32 512, 512
      %19 = vsyncadd [#allocation3], %s18
      %s20 = sshll.u32 [#allocation2], 4
      %s21 = int_to_ptr.vmem [resolvable:$true] %s20
      %26 = dma.hbm_to_vmem [thread:$0]  %s1, 512, %s21, [#allocation3], 256, 256, 16
    $region9: #{tpu_custom_call.1} parent=1 // pred_fallthru
      _
    // Predicated region
    $region10: #{tpu_custom_call.1} parent=1 // pred_check
      _
    $region11: #{tpu_custom_call.1} parent=1 // pred_check_branch
      %28 = sbr.rel (0) target = $region13
    $region12: #{tpu_custom_call.1} parent=1 // pred_region
      _
    $region13: #{tpu_custom_call.1} parent=1 // pred_fallthru
      _
    // Predicated region
    $region14: #{tpu_custom_call.1} parent=1 // pred_check
      _
    $region15: #{tpu_custom_call.1} parent=1 // pred_check_branch
      %30 = sbr.rel (0) target = $region17
    $region16: #{tpu_custom_call.1} parent=1 // pred_region
      _
    $region17: #{tpu_custom_call.1} parent=1 // pred_fallthru
      _
    // Predicated region
    $region18: #{tpu_custom_call.1} parent=1 // pred_check
      _
    $region19: #{tpu_custom_call.1} parent=1 // pred_check_branch
      %32 = sbr.rel (0) target = $region21
    $region20: #{tpu_custom_call.1} parent=1 // pred_region
      _
    $region21: #{tpu_custom_call.1} parent=1 // pred_fallthru
      _
    // Predicated region
    $region22: #{tpu_custom_call.1} parent=1 // pred_check
      _
    $region23: #{tpu_custom_call.1} parent=1 // pred_check_branch
      %34 = sbr.rel (0) target = $region25
    $region24: #{tpu_custom_call.1} parent=1 // pred_region
      _
    $region25: #{tpu_custom_call.1} parent=1 // pred_fallthru
      _
    // Predicated region
    $region26: #{tpu_custom_call.1} parent=1 // pred_check
      _
    $region27: #{tpu_custom_call.1} parent=1 // pred_check_branch
      %36 = sbr.rel (0) target = $region29
    $region28: #{tpu_custom_call.1} parent=1 // pred_region
      %37 = dma.done [#allocation3], 512
    $region29: #{tpu_custom_call.1} parent=1 // pred_fallthru
      _
    %v38 = vld [vmem:[%s0] sm:$0xff]
    %v39 = vld [vmem:[%s0 + $0x8] sm:$0xff]
    %40 = vrot.lane.b32.xlu0 %v38, 17
    %v41 = vpop.permute.xlu0 %40
    %42 = vrot.lane.b32.xlu0 %v39, 17
    %v43 = vpop.permute.xlu0 %42
    %v44 = vlaneseq
    %v45 = vand.u32 %v44, 127
    %vm46 = vcmp.lt.s32.totalorder %v45, 17
    %v47 = vsel %vm46, %v41, %v43
    %v48 = vsel %vm46, %v43, %v41
    %v49 = vld [vmem:[#allocation2] ss:$8 sm:$0x3]
    %v51 = vlaneseq
    %v52 = vshrl.u32 %v51, 7
    %v53 = vsub.s32 0, %v52
    %v54 = vrot.slane %v49, %v53
    %v55 = vlaneseq
    %v56 = vshrl.u32 %v55, 7
    %v57 = vsub.s32 1, %v56
    %v58 = vrot.slane %v49, %v57
    %v61 = vmul.f32 %v48, %v54
    %v62 = vmul.f32 %v47, %v58
    %63 = vrot.lane.b32.xlu0 %v38, 16
    %v64 = vpop.permute.xlu0 %63
    %65 = vrot.lane.b32.xlu0 %v39, 16
    %v66 = vpop.permute.xlu0 %65
    %vm67 = vcmp.lt.s32.totalorder %v45, 16
    %v68 = vsel %vm67, %v64, %v66
    %v69 = vsel %vm67, %v66, %v64
    %s70 = scalar_lea.vmem [#allocation2], 1
    %v71 = vld [vmem:[%s70] ss:$8 sm:$0x3]
    %v73 = vlaneseq
    %v74 = vshrl.u32 %v73, 7
    %v75 = vsub.s32 0, %v74
    %v76 = vrot.slane %v71, %v75
    %v77 = vlaneseq
    %v78 = vshrl.u32 %v77, 7
    %v79 = vsub.s32 1, %v78
    %v80 = vrot.slane %v71, %v79
    %v83 = vmul.f32 %v69, %v76
    %v84 = vmul.f32 %v68, %v80
    %85 = vrot.lane.b32.xlu0 %v38, 15
    %v86 = vpop.permute.xlu0 %85
    %87 = vrot.lane.b32.xlu0 %v39, 15
    %v88 = vpop.permute.xlu0 %87
    %vm89 = vcmp.lt.s32.totalorder %v45, 15
    %v90 = vsel %vm89, %v86, %v88
    %v91 = vsel %vm89, %v88, %v86
    %s92 = scalar_lea.vmem [#allocation2], 2
    %v93 = vld [vmem:[%s92] ss:$8 sm:$0x3]
    %v95 = vlaneseq
    %v96 = vshrl.u32 %v95, 7
    %v97 = vsub.s32 0, %v96
    %v98 = vrot.slane %v93, %v97
    %v99 = vlaneseq
    %v100 = vshrl.u32 %v99, 7
    %v101 = vsub.s32 1, %v100
    %v102 = vrot.slane %v93, %v101
    %v105 = vmul.f32 %v91, %v98
    %v106 = vmul.f32 %v90, %v102
    %107 = vrot.lane.b32.xlu0 %v38, 1
    %v108 = vpop.permute.xlu0 %107
    %109 = vrot.lane.b32.xlu0 %v39, 1
    %v110 = vpop.permute.xlu0 %109
    %vm111 = vcmp.lt.s32.totalorder %v45, 1
    %v112 = vsel %vm111, %v108, %v110
    %v113 = vsel %vm111, %v110, %v108
    %s114 = scalar_lea.vmem [#allocation2], 3
    %v115 = vld [vmem:[%s114] ss:$8 sm:$0x3]
    %v117 = vlaneseq
    %v118 = vshrl.u32 %v117, 7
    %v119 = vsub.s32 0, %v118
    %v120 = vrot.slane %v115, %v119
    %v121 = vlaneseq
    %v122 = vshrl.u32 %v121, 7
    %v123 = vsub.s32 1, %v122
    %v124 = vrot.slane %v115, %v123
    %v127 = vmul.f32 %v113, %v120
    %v128 = vmul.f32 %v112, %v124
    %129 = vrot.lane.b32.xlu0 %v38, 127
    %v130 = vpop.permute.xlu0 %129
    %131 = vrot.lane.b32.xlu0 %v39, 127
    %v132 = vpop.permute.xlu0 %131
    %vm133 = vcmp.lt.s32.totalorder %v45, 127
    %v134 = vsel %vm133, %v130, %v132
    %v135 = vsel %vm133, %v132, %v130
    %s136 = scalar_lea.vmem [#allocation2], 5
    %v137 = vld [vmem:[%s136] ss:$8 sm:$0x3]
    %v139 = vlaneseq
    %v140 = vshrl.u32 %v139, 7
    %v141 = vsub.s32 0, %v140
    %v142 = vrot.slane %v137, %v141
    %v143 = vlaneseq
    %v144 = vshrl.u32 %v143, 7
    %v145 = vsub.s32 1, %v144
    %v146 = vrot.slane %v137, %v145
    %v149 = vmul.f32 %v134, %v142
    %v150 = vmul.f32 %v135, %v146
    %151 = vrot.lane.b32.xlu0 %v38, 113
    %v152 = vpop.permute.xlu0 %151
    %153 = vrot.lane.b32.xlu0 %v39, 113
    %v154 = vpop.permute.xlu0 %153
    %vm155 = vcmp.lt.s32.totalorder %v45, 113
    %v156 = vsel %vm155, %v152, %v154
    %v157 = vsel %vm155, %v154, %v152
    %s158 = scalar_lea.vmem [#allocation2], 6
    %v159 = vld [vmem:[%s158] ss:$8 sm:$0x3]
    %v161 = vlaneseq
    %v162 = vshrl.u32 %v161, 7
    %v163 = vsub.s32 0, %v162
    %v164 = vrot.slane %v159, %v163
    %v165 = vlaneseq
    %v166 = vshrl.u32 %v165, 7
    %v167 = vsub.s32 1, %v166
    %v168 = vrot.slane %v159, %v167
    %v171 = vmul.f32 %v156, %v164
    %v172 = vmul.f32 %v157, %v168
    %173 = vrot.lane.b32.xlu0 %v38, 112
    %v174 = vpop.permute.xlu0 %173
    %175 = vrot.lane.b32.xlu0 %v39, 112
    %v176 = vpop.permute.xlu0 %175
    %vm177 = vcmp.lt.s32.totalorder %v45, 112
    %v178 = vsel %vm177, %v174, %v176
    %v179 = vsel %vm177, %v176, %v174
    %s180 = scalar_lea.vmem [#allocation2], 7
    %v181 = vld [vmem:[%s180] ss:$8 sm:$0x3]
    %v183 = vlaneseq
    %v184 = vshrl.u32 %v183, 7
    %v185 = vsub.s32 0, %v184
    %v186 = vrot.slane %v181, %v185
    %v187 = vlaneseq
    %v188 = vshrl.u32 %v187, 7
    %v189 = vsub.s32 1, %v188
    %v190 = vrot.slane %v181, %v189
    %v193 = vmul.f32 %v178, %v186
    %v194 = vmul.f32 %v179, %v190
    %195 = vrot.lane.b32.xlu0 %v38, 111
    %v196 = vpop.permute.xlu0 %195
    %197 = vrot.lane.b32.xlu0 %v39, 111
    %v198 = vpop.permute.xlu0 %197
    %vm199 = vcmp.lt.s32.totalorder %v45, 111
    %v200 = vsel %vm199, %v196, %v198
    %v201 = vsel %vm199, %v198, %v196
    %s202 = scalar_lea.vmem [#allocation2], 16
    %v203 = vld [vmem:[%s202] ss:$8 sm:$0x3]
    %v205 = vlaneseq
    %v206 = vshrl.u32 %v205, 7
    %v207 = vsub.s32 0, %v206
    %v208 = vrot.slane %v203, %v207
    %v209 = vlaneseq
    %v210 = vshrl.u32 %v209, 7
    %v211 = vsub.s32 1, %v210
    %v212 = vrot.slane %v203, %v211
    %v215 = vmul.f32 %v200, %v208
    %v216 = vmul.f32 %v201, %v212
    %v217 = vld [vmem:[%s2] sm:$0xff]
    %v218 = vld [vmem:[%s3] sm:$0xff]
    %220 = vset.pattern.permute.xlu0 0
    %221 = vperm.xlu0 %220, %v218
    %v222 = vpop.permute.xlu0 %221
    %224 = vmatprep.subr.mxu0 %v62
    %225 = vmatpush1.msra.mxu0 %v61
    %226 = vmatprep.subr.mxu0 %v84
    %227 = vmatpush1.msra.mxu0 %v83
    %228 = vmatprep.subr.mxu0 %v106
    %229 = vmatpush1.msra.mxu0 %v105
    %230 = vmatprep.subr.mxu0 %v128
    %231 = vmatpush1.msra.mxu0 %v127
    %232 = vmatprep.subr.mxu0 %v39
    %233 = vmatpush1.msra.mxu0 %v38
    %234 = vmatprep.subr.mxu0 %v150
    %235 = vmatpush1.msra.mxu0 %v149
    %236 = vmatprep.subr.mxu0 %v172
    %237 = vmatpush1.msra.mxu0 %v171
    %238 = vmatprep.subr.mxu0 %v194
    %239 = vmatpush1.msra.mxu0 %v193
    %240 = vmatprep.subr.mxu0 %v216
    %241 = vmatpush1.msra.mxu0 %v215
    %242 = vmatprep.subr.mxu0 0.0
    %243 = vmatpush1.msra.mxu0 0.0
    %244 = vmatprep.subr.mxu0 0.0
    %245 = vmatpush1.msra.mxu0 0.0
    %246 = vmatprep.subr.mxu0 0.0
    %247 = vmatpush1.msra.mxu0 0.0
    %248 = vmatprep.subr.mxu0 0.0
    %249 = vmatpush1.msra.mxu0 0.0
    %250 = vmatprep.subr.mxu0 0.0
    %251 = vmatpush1.msra.mxu0 0.0
    %252 = vmatprep.subr.mxu0 0.0
    %253 = vmatpush1.msra.mxu0 0.0
    %254 = vmatprep.subr.mxu0 0.0
    %255 = vmatpush1.msra.mxu0 0.0
    %256 = vmatprep.subr.mxu0 0.0
    %257 = vmatpush1.msra.mxu0 0.0
    %258 = vmatprep.subr.mxu0 0.0
    %259 = vmatpush1.msra.mxu0 0.0
    %260 = vmatprep.subr.mxu0 0.0
    %261 = vmatpush1.msra.mxu0 0.0
    %262 = vmatprep.subr.mxu0 0.0
    %263 = vmatpush1.msra.mxu0 0.0
    %264 = vmatprep.subr.mxu0 0.0
    %265 = vmatpush1.msra.mxu0 0.0
    %266 = vmatprep.subr.mxu0 0.0
    %267 = vmatpush1.msra.mxu0 0.0
    %268 = vmatprep.subr.mxu0 0.0
    %269 = vmatpush1.msra.mxu0 0.0
    %270 = vmatprep.subr.mxu0 0.0
    %271 = vmatpush1.msra.mxu0 0.0
    %272 = vmatprep.subr.mxu0 0.0
    %273 = vmatpush1.msra.mxu0 0.0
    %274 = vmatprep.subr.mxu0 0.0
    %275 = vmatpush1.msra.mxu0 0.0
    %276 = vmatprep.subr.mxu0 0.0
    %277 = vmatpush1.msra.mxu0 0.0
    %278 = vmatprep.subr.mxu0 0.0
    %279 = vmatpush1.msra.mxu0 0.0
    %280 = vmatprep.subr.mxu0 0.0
    %281 = vmatpush1.msra.mxu0 0.0
    %282 = vmatprep.subr.mxu0 0.0
    %283 = vmatpush1.msra.mxu0 0.0
    %284 = vmatprep.subr.mxu0 0.0
    %285 = vmatpush1.msra.mxu0 0.0
    %286 = vmatprep.subr.mxu0 0.0
    %287 = vmatpush1.msra.mxu0 0.0
    %288 = vmatprep.mubr.f32.mxu0 0.0
    %289 = vmatmul.mubr.f32.gmra.mrb[0].mxu0 %v217
    %v290 = vpop.f32.mrb[0].mxu0
    %v291 = vadd.f32 %v222, %v290
    %v292 = vpop.f32.mrb[0].mxu0
    %v293 = vadd.f32 %v222, %v292
    %294 = vdwg.mxu0
    %v295 = vsub.f32 0.0, %v291
    %v296 = vsub.f32 0.0, %v293
    %v297 = vmul.f32 %v295, 1.442695
    %v298 = vpow.pop %v297
    %v299 = vmul.f32 %v296, 1.442695
    %v300 = vpow.pop %v299
    %v301 = vadd.f32 %v298, 1.0
    %v302 = vadd.f32 %v300, 1.0
    %v303 = vrcp.pop %v301
    %v304 = vrcp.pop %v302
    %v305 = vmul.f32 %v291, %v303
    %v306 = vmul.f32 %v293, %v304
    %307 = vrot.lane.b32.xlu0 %v305, 17
    %v308 = vpop.permute.xlu0 %307
    %309 = vrot.lane.b32.xlu0 %v306, 17
    %v310 = vpop.permute.xlu0 %309
    %v311 = vsel %vm46, %v308, %v310
    %v312 = vsel %vm46, %v310, %v308
    %v313 = vmul.f32 %v312, %v54
    %v314 = vmul.f32 %v311, %v58
    %315 = vrot.lane.b32.xlu0 %v305, 16
    %v316 = vpop.permute.xlu0 %315
    %317 = vrot.lane.b32.xlu0 %v306, 16
    %v318 = vpop.permute.xlu0 %317
    %v319 = vsel %vm67, %v316, %v318
    %v320 = vsel %vm67, %v318, %v316
    %v321 = vmul.f32 %v320, %v76
    %v322 = vmul.f32 %v319, %v80
    %323 = vrot.lane.b32.xlu0 %v305, 15
    %v324 = vpop.permute.xlu0 %323
    %325 = vrot.lane.b32.xlu0 %v306, 15
    %v326 = vpop.permute.xlu0 %325
    %v327 = vsel %vm89, %v324, %v326
    %v328 = vsel %vm89, %v326, %v324
    %v329 = vmul.f32 %v328, %v98
    %v330 = vmul.f32 %v327, %v102
    %331 = vrot.lane.b32.xlu0 %v305, 1
    %v332 = vpop.permute.xlu0 %331
    %333 = vrot.lane.b32.xlu0 %v306, 1
    %v334 = vpop.permute.xlu0 %333
    %v335 = vsel %vm111, %v332, %v334
    %v336 = vsel %vm111, %v334, %v332
    %v337 = vmul.f32 %v336, %v120
    %v338 = vmul.f32 %v335, %v124
    %339 = vrot.lane.b32.xlu0 %v305, 127
    %v340 = vpop.permute.xlu0 %339
    %341 = vrot.lane.b32.xlu0 %v306, 127
    %v342 = vpop.permute.xlu0 %341
    %v343 = vsel %vm133, %v340, %v342
    %v344 = vsel %vm133, %v342, %v340
    %v345 = vmul.f32 %v343, %v142
    %v346 = vmul.f32 %v344, %v146
    %347 = vrot.lane.b32.xlu0 %v305, 113
    %v348 = vpop.permute.xlu0 %347
    %349 = vrot.lane.b32.xlu0 %v306, 113
    %v350 = vpop.permute.xlu0 %349
    %v351 = vsel %vm155, %v348, %v350
    %v352 = vsel %vm155, %v350, %v348
    %v353 = vmul.f32 %v351, %v164
    %v354 = vmul.f32 %v352, %v168
    %355 = vrot.lane.b32.xlu0 %v305, 112
    %v356 = vpop.permute.xlu0 %355
    %357 = vrot.lane.b32.xlu0 %v306, 112
    %v358 = vpop.permute.xlu0 %357
    %v359 = vsel %vm177, %v356, %v358
    %v360 = vsel %vm177, %v358, %v356
    %v361 = vmul.f32 %v359, %v186
    %v362 = vmul.f32 %v360, %v190
    %363 = vrot.lane.b32.xlu0 %v305, 111
    %v364 = vpop.permute.xlu0 %363
    %365 = vrot.lane.b32.xlu0 %v306, 111
    %v366 = vpop.permute.xlu0 %365
    %v367 = vsel %vm199, %v364, %v366
    %v368 = vsel %vm199, %v366, %v364
    %v369 = vmul.f32 %v367, %v208
    %v370 = vmul.f32 %v368, %v212
    %v371 = vld [vmem:[%s4] sm:$0xff]
    %v372 = vld [vmem:[%s5] sm:$0xff]
    %374 = vset.pattern.permute.xlu0 0
    %375 = vperm.xlu0 %374, %v372
    %v376 = vpop.permute.xlu0 %375
    %378 = vmatprep.subr.mxu0 %v314
    %379 = vmatpush1.msra.mxu0 %v313
    %380 = vmatprep.subr.mxu0 %v322
    %381 = vmatpush1.msra.mxu0 %v321
    %382 = vmatprep.subr.mxu0 %v330
    %383 = vmatpush1.msra.mxu0 %v329
    %384 = vmatprep.subr.mxu0 %v338
    %385 = vmatpush1.msra.mxu0 %v337
    %386 = vmatprep.subr.mxu0 %v306
    %387 = vmatpush1.msra.mxu0 %v305
    %388 = vmatprep.subr.mxu0 %v346
    %389 = vmatpush1.msra.mxu0 %v345
    %390 = vmatprep.subr.mxu0 %v354
    %391 = vmatpush1.msra.mxu0 %v353
    %392 = vmatprep.subr.mxu0 %v362
    %393 = vmatpush1.msra.mxu0 %v361
    %394 = vmatprep.subr.mxu0 %v370
    %395 = vmatpush1.msra.mxu0 %v369
    %396 = vmatprep.subr.mxu0 0.0
    %397 = vmatpush1.msra.mxu0 0.0
    %398 = vmatprep.subr.mxu0 0.0
    %399 = vmatpush1.msra.mxu0 0.0
    %400 = vmatprep.subr.mxu0 0.0
    %401 = vmatpush1.msra.mxu0 0.0
    %402 = vmatprep.subr.mxu0 0.0
    %403 = vmatpush1.msra.mxu0 0.0
    %404 = vmatprep.subr.mxu0 0.0
    %405 = vmatpush1.msra.mxu0 0.0
    %406 = vmatprep.subr.mxu0 0.0
    %407 = vmatpush1.msra.mxu0 0.0
    %408 = vmatprep.subr.mxu0 0.0
    %409 = vmatpush1.msra.mxu0 0.0
    %410 = vmatprep.subr.mxu0 0.0
    %411 = vmatpush1.msra.mxu0 0.0
    %412 = vmatprep.subr.mxu0 0.0
    %413 = vmatpush1.msra.mxu0 0.0
    %414 = vmatprep.subr.mxu0 0.0
    %415 = vmatpush1.msra.mxu0 0.0
    %416 = vmatprep.subr.mxu0 0.0
    %417 = vmatpush1.msra.mxu0 0.0
    %418 = vmatprep.subr.mxu0 0.0
    %419 = vmatpush1.msra.mxu0 0.0
    %420 = vmatprep.subr.mxu0 0.0
    %421 = vmatpush1.msra.mxu0 0.0
    %422 = vmatprep.subr.mxu0 0.0
    %423 = vmatpush1.msra.mxu0 0.0
    %424 = vmatprep.subr.mxu0 0.0
    %425 = vmatpush1.msra.mxu0 0.0
    %426 = vmatprep.subr.mxu0 0.0
    %427 = vmatpush1.msra.mxu0 0.0
    %428 = vmatprep.subr.mxu0 0.0
    %429 = vmatpush1.msra.mxu0 0.0
    %430 = vmatprep.subr.mxu0 0.0
    %431 = vmatpush1.msra.mxu0 0.0
    %432 = vmatprep.subr.mxu0 0.0
    %433 = vmatpush1.msra.mxu0 0.0
    %434 = vmatprep.subr.mxu0 0.0
    %435 = vmatpush1.msra.mxu0 0.0
    %436 = vmatprep.subr.mxu0 0.0
    %437 = vmatpush1.msra.mxu0 0.0
    %438 = vmatprep.subr.mxu0 0.0
    %439 = vmatpush1.msra.mxu0 0.0
    %440 = vmatprep.subr.mxu0 0.0
    %441 = vmatpush1.msra.mxu0 0.0
    %442 = vmatprep.mubr.f32.mxu0 0.0
    %443 = vmatmul.mubr.f32.gmra.mrb[0].mxu0 %v371
    %v444 = vpop.f32.mrb[0].mxu0
    %v445 = vadd.f32 %v376, %v444
    %v446 = vpop.f32.mrb[0].mxu0
    %v447 = vadd.f32 %v376, %v446
    %448 = vdwg.mxu0
    %v449 = vsub.f32 0.0, %v445
    %v450 = vsub.f32 0.0, %v447
    %v451 = vmul.f32 %v449, 1.442695
    %v452 = vpow.pop %v451
    %v453 = vmul.f32 %v450, 1.442695
    %v454 = vpow.pop %v453
    %v455 = vadd.f32 %v452, 1.0
    %v456 = vadd.f32 %v454, 1.0
    %v457 = vrcp.pop %v455
    %v458 = vrcp.pop %v456
    %v459 = vmul.f32 %v445, %v457
    %v460 = vmul.f32 %v447, %v458
    %v461 = vadd.f32 %v459, %v38
    %v462 = vadd.f32 %v460, %v39
    %463 = vst [vmem:[#allocation5] sm:$0xff] %v461
    %464 = vst [vmem:[#allocation5 + $0x8] sm:$0xff] %v462
    // Predicated region
    $region30: #{tpu_custom_call.1} parent=1 // pred_check
      _
    $region31: #{tpu_custom_call.1} parent=1 // pred_check_branch
      %466 = sbr.rel (0) target = $region33
    $region32: #{tpu_custom_call.1} parent=1 // pred_region
      %s468 = ssub.s32 256, 256
      %469 = vsyncadd [#allocation4], %s468
      %s471 = sshll.u32 [#allocation5], 4
      %s472 = int_to_ptr.vmem [resolvable:$true] %s471
      %474 = dma.vmem_to_hbm [thread:$0]  %s472, 256, %s6, [#allocation4]
    $region33: #{tpu_custom_call.1} parent=1 // pred_fallthru
      _
    // Predicated region
    $region34: #{tpu_custom_call.1} parent=1 // pred_check
      _
    $region35: #{tpu_custom_call.1} parent=1 // pred_check_branch
      %476 = sbr.rel (0) target = $region37
    $region36: #{tpu_custom_call.1} parent=1 // pred_region
      %477 = dma.done [#allocation4], 256
    $region37: #{tpu_custom_call.1} parent=1 // pred_fallthru
      _
    %478 = vsyncpa [#allocation3], 1
    %479 = vsyncpa [#allocation4], 1

</llo_original>
